<compile_context>
chip_gen: v7x
topology: tpu7x:2x2x1
jax: 0.10.0
libtpu: 0.0.40
codegen_flags: <defaults>
</compile_context>

<pallas_src>
import jax
import jax.numpy as jnp
from jax.experimental import pallas as pl
from jax.experimental.pallas import tpu as pltpu

LANES = 128
CHUNK_ROWS = 1024  # compute-chunk rows (512 KiB f32 temps per intermediate)


def _chip_config():
    """Per-chip tiling/VMEM budget; conservative fallback if detection fails."""
    kind = ""
    try:
        kind = jax.devices()[0].device_kind.lower()
    except Exception:
        pass
    vmem_cap = None
    try:
        vmem_cap = pltpu.get_tpu_info().vmem_capacity_bytes
    except Exception:
        pass
    is_v7 = "v7" in kind
    small_vmem = is_v7 or (vmem_cap is not None and vmem_cap <= (64 << 20))
    if small_vmem:
        # v7x: 64 MiB VMEM/TC -> 4 MiB input blocks (16 MiB of double-buffered
        # inputs) and a 2-way "parallel" split across its two TensorCores.
        return dict(max_block_bytes=4 << 20,
                    vmem_limit_bytes=48 << 20,
                    num_slices=2 if is_v7 else 1)
    # v5e / v6e: 128 MiB VMEM, single TensorCore -> bigger blocks, no split.
    return dict(max_block_bytes=8 << 20,
                vmem_limit_bytes=64 << 20,
                num_slices=1)


def _make_kernel(rows, block_rows, chunk_rows, blocks_per_slice, needs_mask):
    n_chunks = block_rows // chunk_rows

    def kernel(pred_ref, gt_ref, total_ref, npos_ref):
        i = pl.program_id(1)

        @pl.when(i == 0)
        def _init():
            total_ref[...] = jnp.zeros_like(total_ref)
            npos_ref[...] = jnp.zeros_like(npos_ref)

        def accum(pred, gt):
            # pred/gt: (chunk_rows, 128) f32.  One EUP log per element; the
            # pos/neg terms are merged into a single contribution via selects
            # (no mask float-casts / mask multiplies).
            is_pos = gt == 1.0
            one_m_pred = 1.0 - pred
            one_m_gt = 1.0 - gt
            sq = one_m_gt * one_m_gt
            neg_w = sq * sq                               # (1 - gt)^4
            log_sel = jnp.log(jnp.where(is_pos, pred, one_m_pred))
            pos_term = log_sel * (one_m_pred * one_m_pred)
            neg_term = log_sel * (pred * pred) * neg_w
            contrib = jnp.where(is_pos, pos_term,
                                jnp.where(gt < 1.0, neg_term, 0.0))
            # Reduce to one full vreg (8,128): cross-vreg vadd tree only; the
            # final sublane collapse happens once in the JAX epilogue.
            total_ref[...] += jnp.sum(contrib.reshape(-1, 8, LANES), axis=0)
            npos_ref[...] += jnp.sum(
                is_pos.astype(jnp.float32).reshape(-1, 8, LANES), axis=0)

        def chunk_fast(j):
            start = pl.multiple_of(j * chunk_rows, chunk_rows)
            accum(pred_ref[pl.ds(start, chunk_rows), :].astype(jnp.float32),
                  gt_ref[pl.ds(start, chunk_rows), :].astype(jnp.float32))

        if not needs_mask:
            @pl.loop(0, n_chunks)
            def _(j):
                chunk_fast(j)
            return

        c = pl.program_id(0)
        row0 = (c * blocks_per_slice + i) * block_rows      # logical first row
        block_full = row0 + block_rows <= rows

        # Fast path: fully-valid block — no masking work at all.
        @pl.when(block_full)
        def _fast():
            @pl.loop(0, n_chunks)
            def _(j):
                chunk_fast(j)

        # Slow path: partial last block or clamped redundant block of the
        # 2-way split.  Pays the iota/select masking only here; fully
        # out-of-range chunks are skipped entirely.
        @pl.when(jnp.logical_not(block_full))
        def _tail():
            @pl.loop(0, n_chunks)
            def _(j):
                start = pl.multiple_of(j * chunk_rows, chunk_rows)

                @pl.when(row0 + start < rows)
                def _():
                    pred = pred_ref[pl.ds(start, chunk_rows), :].astype(jnp.float32)
                    gt = gt_ref[pl.ds(start, chunk_rows), :].astype(jnp.float32)
                    r = jax.lax.broadcasted_iota(jnp.int32, gt.shape, 0) + (row0 + start)
                    valid = r < rows
                    # pred=0.5 / gt=2.0 contribute exactly zero (and keep the
                    # log finite) for every invalid row.
                    pred = jnp.where(valid, pred, 0.5)
                    gt = jnp.where(valid, gt, 2.0)
                    accum(pred, gt)

    return kernel


def focal_loss_v2(pred, gt, *, max_block_bytes=None, chunk_target=None,
                  num_slices=None, vmem_limit_bytes=None):
    """Pallas implementation of FocalLoss_v2.forward(out, target)."""
    assert pred.shape == gt.shape
    n = pred.size
    assert n > 0

    cfg = _chip_config()
    if max_block_bytes is None:
        max_block_bytes = cfg["max_block_bytes"]
    if num_slices is None:
        num_slices = cfg["num_slices"]
    if vmem_limit_bytes is None:
        vmem_limit_bytes = cfg["vmem_limit_bytes"]
    if chunk_target is None:
        chunk_target = CHUNK_ROWS
    assert num_slices in (1, 2)

    isz_p = jnp.dtype(pred.dtype).itemsize
    isz_g = jnp.dtype(gt.dtype).itemsize
    itemsize = max(isz_p, isz_g)                  # conservative for block bytes
    pack = max(8, 32 // min(isz_p, isz_g))        # sublane packing: 8 f32 / 16 bf16
    align = LANES * pack

    # Minimal (pack x 128) alignment pad only; the aligned common case copies
    # nothing (zero-width pads are elided by XLA).
    n_pad = pl.cdiv(n, align) * align
    pred_f = jnp.ravel(pred)
    gt_f = jnp.ravel(gt)
    if n_pad != n:
        pred_f = jnp.pad(pred_f, (0, n_pad - n), constant_values=0.5)
        gt_f = jnp.pad(gt_f, (0, n_pad - n), constant_values=2.0)

    rows = n_pad // LANES

    # ---- tiling: big DMA blocks, fixed-size compute chunks ---------------
    if rows <= chunk_target:
        chunk_rows = rows
        block_rows = rows
    else:
        chunk_rows = chunk_target
        max_block_rows = max(
            chunk_rows,
            (max_block_bytes // (LANES * itemsize)) // chunk_rows * chunk_rows)
        block_rows = min(max_block_rows, (rows // chunk_rows) * chunk_rows)

    n_blocks = pl.cdiv(rows, block_rows)
    if n_blocks < 2:
        num_slices = 1
    if num_slices == 2 and n_blocks % 2 == 1:
        # Best effort: shave block_rows so the block count is even and the
        # 2-way split needs no clamped redundant block.
        alt = pl.cdiv(pl.cdiv(rows, n_blocks + 1), chunk_rows) * chunk_rows
        if alt >= chunk_rows and pl.cdiv(rows, alt) % 2 == 0:
            block_rows = alt
            n_blocks = pl.cdiv(rows, alt)

    blocks_per_slice = pl.cdiv(n_blocks, num_slices)
    needs_mask = (rows % block_rows != 0) or (blocks_per_slice * num_slices != n_blocks)

    pred2 = pred_f.reshape(rows, LANES)
    gt2 = gt_f.reshape(rows, LANES)

    if needs_mask:
        def in_map(c, i):
            return (jnp.minimum(c * blocks_per_slice + i, n_blocks - 1), 0)
    else:
        def in_map(c, i):
            return (c * blocks_per_slice + i, 0)

    in_spec = pl.BlockSpec((block_rows, LANES), in_map)
    out_spec = pl.BlockSpec((None, 8, LANES), lambda c, i: (c, 0, 0))
    acc_shape = jax.ShapeDtypeStruct((num_slices, 8, LANES), jnp.float32)

    kernel = _make_kernel(rows, block_rows, chunk_rows, blocks_per_slice, needs_mask)

    total_v, npos_v = pl.pallas_call(
        kernel,
        out_shape=(acc_shape, acc_shape),
        grid_spec=pltpu.PrefetchScalarGridSpec(
            num_scalar_prefetch=0,
            grid=(num_slices, blocks_per_slice),
            in_specs=[in_spec, in_spec],
            out_specs=[out_spec, out_spec],
        ),
        compiler_params=pltpu.CompilerParams(
            dimension_semantics=("parallel", "arbitrary"),
            vmem_limit_bytes=vmem_limit_bytes,
        ),
    )(pred2, gt2)

    total = jnp.sum(total_v)      # pos_loss + neg_loss
    num_pos = jnp.sum(npos_v)

    # loss = -neg_loss                        if num_pos == 0   (pos terms are 0)
    #      = -(pos_loss + neg_loss)/num_pos   otherwise
    return jnp.where(num_pos == 0.0, -total,
                     -total / jnp.maximum(num_pos, 1.0))


def _reference(pred, gt):
    pred = pred.astype(jnp.float32)
    gt = gt.astype(jnp.float32)
    pos_inds = (gt == 1.0).astype(jnp.float32)
    neg_inds = (gt < 1.0).astype(jnp.float32)
    neg_w = (1.0 - gt) ** 4
    pos_loss = jnp.sum(jnp.log(pred) * (1.0 - pred) ** 2 * pos_inds)
    neg_loss = jnp.sum(jnp.log(1.0 - pred) * pred ** 2 * neg_w * neg_inds)
    num_pos = jnp.sum(pos_inds)
    return jnp.where(num_pos == 0.0, -neg_loss,
                     -(pos_loss + neg_loss) / jnp.maximum(num_pos, 1.0))


if __name__ == "__main__":
    key = jax.random.PRNGKey(0)
    k_pred, k_gt = jax.random.split(key)

    B, C, H, W = 2, 4, 16, 16  # NCHW, matches the PyTorch convention

    # pred in (0, 1) like a sigmoid heatmap output.
    pred = jax.nn.sigmoid(jax.random.normal(k_pred, (B, C, H, W), jnp.float32))
    pred = jnp.clip(pred, 1e-4, 1.0 - 1e-4)
    # gt: heatmap in [0, 1] with a few exact-1 peaks.
    gt = jax.random.uniform(k_gt, (B, C, H, W), jnp.float32) * 0.9
    gt = gt.at[:, :, 4, 4].set(1.0)
    gt = gt.at[:, :, 10, 7].set(1.0)

    # 1) default path (single block).
    loss = jax.block_until_ready(focal_loss_v2(pred, gt))
    ref = _reference(pred, gt)
    assert jnp.allclose(loss, ref, rtol=1e-5, atol=1e-5), (loss, ref)

    # 2) multi-chunk / multi-block / even 2-way split, no masking (fast path).
    kbp, kbg = jax.random.split(jax.random.PRNGKey(2))
    shapeB = (2, 4, 64, 64)  # 32768 elems -> rows=256
    predB = jnp.clip(jax.nn.sigmoid(jax.random.normal(kbp, shapeB, jnp.float32)),
                     1e-4, 1.0 - 1e-4)
    gtB = jax.random.uniform(kbg, shapeB, jnp.float32) * 0.9
    gtB = gtB.at[:, :, 10, 7].set(1.0)
    lossB = jax.block_until_ready(
        focal_loss_v2(predB, gtB, max_block_bytes=128 * LANES * 4,
                      chunk_target=64, num_slices=2))
    refB = _reference(predB, gtB)
    assert jnp.allclose(lossB, refB, rtol=1e-5, atol=1e-5), (lossB, refB)

    # 3) odd block count with 2-way split (clamped redundant block) + padding.
    k2p, k2g = jax.random.split(jax.random.PRNGKey(1))
    shape2 = (2, 4, 20, 16)  # 2560 elems -> padded to rows=24
    pred2 = jnp.clip(jax.nn.sigmoid(jax.random.normal(k2p, shape2, jnp.float32)),
                     1e-4, 1.0 - 1e-4)
    gt2 = jax.random.uniform(k2g, shape2, jnp.float32) * 0.9
    gt2 = gt2.at[:, :, 3, 5].set(1.0)
    loss2 = jax.block_until_ready(
        focal_loss_v2(pred2, gt2, max_block_bytes=8 * LANES * 4,
                      chunk_target=8, num_slices=2))
    ref2 = _reference(pred2, gt2)
    assert jnp.allclose(loss2, ref2, rtol=1e-5, atol=1e-5), (loss2, ref2)

    # 4) partial last block (OOB block window) with intra-chunk iota masking.
    loss2b = jax.block_until_ready(
        focal_loss_v2(pred2, gt2, max_block_bytes=16 * LANES * 4,
                      chunk_target=16, num_slices=1))
    assert jnp.allclose(loss2b, ref2, rtol=1e-5, atol=1e-5), (loss2b, ref2)

    # 5) num_pos == 0 branch.
    gt3 = jax.random.uniform(k2g, (B, C, H, W), jnp.float32) * 0.9
    loss3 = jax.block_until_ready(focal_loss_v2(pred, gt3))
    ref3 = _reference(pred, gt3)
    assert jnp.allclose(loss3, ref3, rtol=1e-5, atol=1e-5), (loss3, ref3)

    # 6) bf16 ingestion (halves HBM traffic); in-kernel math stays f32.
    pred_bf = jnp.clip(pred, 0.05, 0.95).astype(jnp.bfloat16)
    gt_bf = gt.astype(jnp.bfloat16)
    loss_bf = jax.block_until_ready(focal_loss_v2(pred_bf, gt_bf))
    ref_bf = _reference(pred_bf, gt_bf)
    assert jnp.allclose(loss_bf, ref_bf, rtol=1e-4, atol=1e-4), (loss_bf, ref_bf)

    print("KERNEL_OK")
</pallas_src>

<mosaic_0001>
module attributes {stable_mosaic.version = 11 : i64} {
  func.func @kernel(%arg0: i32, %arg1: i32, %arg2: memref<16x128xf32, #tpu.memory_space<vmem>>, %arg3: memref<16x128xf32, #tpu.memory_space<vmem>>, %arg4: memref<1x8x128xf32, #tpu.memory_space<vmem>>, %arg5: memref<1x8x128xf32, #tpu.memory_space<vmem>>) attributes {dimension_semantics = [#tpu.dimension_semantics<parallel>, #tpu.dimension_semantics<arbitrary>], iteration_bounds = array<i64: 1, 1>, scalar_prefetch = 0 : i64, scratch_operands = 0 : i64, tpu.core_type = #tpu.core_type<tc>, window_params = [{transform_indices = @transform_0, window_bounds = array<i64: 16, 128>}, {transform_indices = @transform_1, window_bounds = array<i64: 16, 128>}, {transform_indices = @transform_2, window_bounds = array<i64: 1, 8, 128>}, {transform_indices = @transform_3, window_bounds = array<i64: 1, 8, 128>}]} {
    %c0_i32 = arith.constant 0 : i32
    %0 = arith.cmpi eq, %arg1, %c0_i32 : i32
    %1 = arith.extui %0 : i1 to i32
    %c0_i32_0 = arith.constant 0 : i32
    %2 = arith.cmpi ne, %1, %c0_i32_0 : i32
    scf.if %2 {
      %cst_23 = arith.constant 0.000000e+00 : f32
      %49 = vector.broadcast %cst_23 : f32 to vector<8x128xf32>
      %c0_24 = arith.constant 0 : index
      %c0_25 = arith.constant 0 : index
      %c0_26 = arith.constant 0 : index
      %50 = vector.load %arg4[%c0_24, %c0_25, %c0_26] : memref<1x8x128xf32, #tpu.memory_space<vmem>>, vector<1x8x128xf32>
      %51 = vector.shape_cast %50 : vector<1x8x128xf32> to vector<8x128xf32>
      %52 = vector.shape_cast %49 : vector<8x128xf32> to vector<1x8x128xf32>
      tpu.vector_store %arg4[%c0_24, %c0_25, %c0_26], %52 {strides = array<i32>} : memref<1x8x128xf32, #tpu.memory_space<vmem>>, vector<1x8x128xf32>,
      %cst_27 = arith.constant 0.000000e+00 : f32
      %53 = vector.broadcast %cst_27 : f32 to vector<8x128xf32>
      %c0_28 = arith.constant 0 : index
      %c0_29 = arith.constant 0 : index
      %c0_30 = arith.constant 0 : index
      %54 = vector.load %arg5[%c0_28, %c0_29, %c0_30] : memref<1x8x128xf32, #tpu.memory_space<vmem>>, vector<1x8x128xf32>
      %55 = vector.shape_cast %54 : vector<1x8x128xf32> to vector<8x128xf32>
      %56 = vector.shape_cast %53 : vector<8x128xf32> to vector<1x8x128xf32>
      tpu.vector_store %arg5[%c0_28, %c0_29, %c0_30], %56 {strides = array<i32>} : memref<1x8x128xf32, #tpu.memory_space<vmem>>, vector<1x8x128xf32>,
    } else {
    }
    %c0_i32_1 = arith.constant 0 : i32
    %c1_i32 = arith.constant 1 : i32
    %3 = arith.muli %c0_i32_1, %c1_i32 : i32
    %c0_i32_2 = arith.constant 0 : i32
    %4 = arith.addi %c0_i32_2, %3 : i32
    %c16_i32 = arith.constant 16 : i32
    %5 = arith.muli %4, %c16_i32 : i32
    %6 = tpu.assume_multiple %5, 16 : i32
    %7 = arith.index_cast %6 : i32 to index
    %c0 = arith.constant 0 : index
    %8 = vector.load %arg2[%7, %c0] : memref<16x128xf32, #tpu.memory_space<vmem>>, vector<16x128xf32>
    %9 = arith.index_cast %6 : i32 to index
    %c0_3 = arith.constant 0 : index
    %10 = vector.load %arg3[%9, %c0_3] : memref<16x128xf32, #tpu.memory_space<vmem>>, vector<16x128xf32>
    %cst = arith.constant 1.000000e+00 : f32
    %11 = vector.broadcast %cst : f32 to vector<16x128xf32>
    %12 = arith.cmpf oeq, %10, %11 : vector<16x128xf32>
    %cst_4 = arith.constant 1.000000e+00 : f32
    %13 = vector.broadcast %cst_4 : f32 to vector<16x128xf32>
    %14 = arith.subf %13, %8 : vector<16x128xf32>
    %cst_5 = arith.constant 1.000000e+00 : f32
    %15 = vector.broadcast %cst_5 : f32 to vector<16x128xf32>
    %16 = arith.subf %15, %10 : vector<16x128xf32>
    %17 = arith.mulf %16, %16 : vector<16x128xf32>
    %18 = arith.mulf %17, %17 : vector<16x128xf32>
    %19 = arith.select %12, %8, %14 : vector<16x128xi1>, vector<16x128xf32>
    %20 = math.log %19 : vector<16x128xf32>
    %21 = arith.mulf %14, %14 : vector<16x128xf32>
    %22 = arith.mulf %20, %21 : vector<16x128xf32>
    %23 = arith.mulf %8, %8 : vector<16x128xf32>
    %24 = arith.mulf %20, %23 : vector<16x128xf32>
    %25 = arith.mulf %24, %18 : vector<16x128xf32>
    %cst_6 = arith.constant 1.000000e+00 : f32
    %26 = vector.broadcast %cst_6 : f32 to vector<16x128xf32>
    %27 = arith.cmpf olt, %10, %26 : vector<16x128xf32>
    %cst_7 = arith.constant 0.000000e+00 : f32
    %28 = vector.broadcast %cst_7 : f32 to vector<16x128xf32>
    %29 = arith.select %27, %25, %28 : vector<16x128xi1>, vector<16x128xf32>
    %30 = arith.select %12, %22, %29 : vector<16x128xi1>, vector<16x128xf32>
    %c0_8 = arith.constant 0 : index
    %c0_9 = arith.constant 0 : index
    %c0_10 = arith.constant 0 : index
    %31 = vector.load %arg4[%c0_8, %c0_9, %c0_10] : memref<1x8x128xf32, #tpu.memory_space<vmem>>, vector<1x8x128xf32>
    %32 = vector.shape_cast %31 : vector<1x8x128xf32> to vector<8x128xf32>
    %33 = vector.shape_cast %30 : vector<16x128xf32> to vector<2x8x128xf32>
    %cst_11 = arith.constant dense<0.000000e+00> : vector<8x128xf32>
    %34 = vector.multi_reduction <add>, %33, %cst_11 [0] : vector<2x8x128xf32> to vector<8x128xf32>
    %35 = arith.addf %32, %34 : vector<8x128xf32>
    %c0_12 = arith.constant 0 : index
    %c0_13 = arith.constant 0 : index
    %c0_14 = arith.constant 0 : index
    %36 = vector.load %arg4[%c0_12, %c0_13, %c0_14] : memref<1x8x128xf32, #tpu.memory_space<vmem>>, vector<1x8x128xf32>
    %37 = vector.shape_cast %36 : vector<1x8x128xf32> to vector<8x128xf32>
    %38 = vector.shape_cast %35 : vector<8x128xf32> to vector<1x8x128xf32>
    tpu.vector_store %arg4[%c0_12, %c0_13, %c0_14], %38 {strides = array<i32>} : memref<1x8x128xf32, #tpu.memory_space<vmem>>, vector<1x8x128xf32>,
    %c0_15 = arith.constant 0 : index
    %c0_16 = arith.constant 0 : index
    %c0_17 = arith.constant 0 : index
    %39 = vector.load %arg5[%c0_15, %c0_16, %c0_17] : memref<1x8x128xf32, #tpu.memory_space<vmem>>, vector<1x8x128xf32>
    %40 = vector.shape_cast %39 : vector<1x8x128xf32> to vector<8x128xf32>
    %41 = arith.extui %12 : vector<16x128xi1> to vector<16x128xi32>
    %42 = arith.sitofp %41 : vector<16x128xi32> to vector<16x128xf32>
    %43 = vector.shape_cast %42 : vector<16x128xf32> to vector<2x8x128xf32>
    %cst_18 = arith.constant dense<0.000000e+00> : vector<8x128xf32>
    %44 = vector.multi_reduction <add>, %43, %cst_18 [0] : vector<2x8x128xf32> to vector<8x128xf32>
    %45 = arith.addf %40, %44 : vector<8x128xf32>
    %c0_19 = arith.constant 0 : index
    %c0_20 = arith.constant 0 : index
    %c0_21 = arith.constant 0 : index
    %46 = vector.load %arg5[%c0_19, %c0_20, %c0_21] : memref<1x8x128xf32, #tpu.memory_space<vmem>>, vector<1x8x128xf32>
    %47 = vector.shape_cast %46 : vector<1x8x128xf32> to vector<8x128xf32>
    %48 = vector.shape_cast %45 : vector<8x128xf32> to vector<1x8x128xf32>
    tpu.vector_store %arg5[%c0_19, %c0_20, %c0_21], %48 {strides = array<i32>} : memref<1x8x128xf32, #tpu.memory_space<vmem>>, vector<1x8x128xf32>,
    %c1_i32_22 = arith.constant 1 : i32
    return
  }
  func.func @transform_0(%arg0: i32, %arg1: i32) -> (i32, i32) {
    %c1_i32 = arith.constant 1 : i32
    %0 = arith.muli %arg0, %c1_i32 : i32
    %1 = arith.addi %0, %arg1 : i32
    %c0_i32 = arith.constant 0 : i32
    %c0_i32_0 = arith.constant 0 : i32
    return %1, %c0_i32 : i32, i32
  }
  func.func @transform_1(%arg0: i32, %arg1: i32) -> (i32, i32) {
    %c1_i32 = arith.constant 1 : i32
    %0 = arith.muli %arg0, %c1_i32 : i32
    %1 = arith.addi %0, %arg1 : i32
    %c0_i32 = arith.constant 0 : i32
    %c0_i32_0 = arith.constant 0 : i32
    return %1, %c0_i32 : i32, i32
  }
  func.func @transform_2(%arg0: i32, %arg1: i32) -> (i32, i32, i32) {
    %c0_i32 = arith.constant 0 : i32
    %c0_i32_0 = arith.constant 0 : i32
    %c0_i32_1 = arith.constant 0 : i32
    return %arg0, %c0_i32, %c0_i32_0 : i32, i32, i32
  }
  func.func @transform_3(%arg0: i32, %arg1: i32) -> (i32, i32, i32) {
    %c0_i32 = arith.constant 0 : i32
    %c0_i32_0 = arith.constant 0 : i32
    %c0_i32_1 = arith.constant 0 : i32
    return %arg0, %c0_i32, %c0_i32_0 : i32, i32, i32
  }
}

</mosaic_0001>

<llo_original>
// kernel: tpu_custom_call.1
$region0: #{tpu_custom_call.1}
  #allocation0 [shape = 'u32[]', space=smem, size = 0x4, offset = 0x4, fixed_abs, tag = 'smem constant byte address 0x4 - core index']
  #allocation1 [shape = 'u32[144,128]{1,0:T(1,128)}', space=vmem, size = 0x12000, scoped, tag = 'internal scratch']
  %s0 = inlined_call_operand.hbm [shape: f32[16,128], index: 0, kind: input, shape index: {}]
  %s1 = inlined_call_operand.hbm [shape: f32[16,128], index: 1, kind: input, shape index: {}]
  %s2 = inlined_call_operand.hbm [shape: f32[1,8,128], index: 2, kind: output, shape index: {0}]
  %s3 = inlined_call_operand.hbm [shape: f32[1,8,128], index: 3, kind: output, shape index: {1}]
  %4 = xla_tuple %s2, %s3
  %s5 = sld [smem:[#allocation0]]
  $region38: #{tpu_custom_call.1} parent=0
    _
  %s7 = ssub.s32 1, %s5
  %s8 = scalar_select 0, %s7, %s5
  $region1: #{tpu_custom_call.1} parent=0
    #allocation2 [shape = 'u8[8192]{0}', space=vmem, size = 0x2000, scoped, tag = 'input window, operand 0, single buffered']
    #allocation3 [shape = 's32[1]{0}', space=sflag, size = 0x4, scoped, tag = 'scoped memory for tpu_custom_call.1']
    #allocation4 [shape = 's32[1]{0}', space=sflag, size = 0x4, scoped, tag = 'scoped memory for tpu_custom_call.1']
    #allocation5 [shape = 'u8[8192]{0}', space=vmem, size = 0x2000, scoped, tag = 'input window, operand 1, single buffered']
    #allocation6 [shape = 's32[1]{0}', space=sflag, size = 0x4, scoped, tag = 'scoped memory for tpu_custom_call.1']
    #allocation7 [shape = 'u8[4096]{0}', space=vmem, size = 0x1000, scoped, tag = 'output window, operand 0, single buffered']
    #allocation8 [shape = 'u8[4096]{0}', space=vmem, size = 0x1000, scoped, tag = 'output window, operand 1, single buffered']
    #allocation9 [shape = 's32[1]{0}', space=sflag, size = 0x4, scoped, tag = 'scoped memory for tpu_custom_call.1']
    %9 = vsyncpa [#allocation3], 0
    %10 = vsyncpa [#allocation6], 0
    %11 = vsyncpa [#allocation4], 0
    %12 = vsyncpa [#allocation9], 0
    // Predicated region
    $region2: #{tpu_custom_call.1} parent=1 // pred_check
      _
    $region3: #{tpu_custom_call.1} parent=1 // pred_check_branch
      %14 = sbr.rel (0) target = $region5
    $region4: #{tpu_custom_call.1} parent=1 // pred_region
      %s15 = sadd.s32 0, 0
      %s16 = smul.u32 2, %s15
      %s18 = ssub.s32 256, 256
      %19 = vsyncadd [#allocation3], %s18
      %s20 = smul.addr %s16, 128
      %s21 = scalar_lea.hbm %s0, %s20
      %s22 = sshll.u32 [#allocation2], 4
      %s23 = int_to_ptr.vmem [resolvable:$true] %s22
      %28 = dma.hbm_to_vmem [thread:$0]  %s21, 256, %s23, [#allocation3], 128, 128, 8
    $region5: #{tpu_custom_call.1} parent=1 // pred_fallthru
      _
    // Predicated region
    $region6: #{tpu_custom_call.1} parent=1 // pred_check
      _
    $region7: #{tpu_custom_call.1} parent=1 // pred_check_branch
      %30 = sbr.rel (0) target = $region9
    $region8: #{tpu_custom_call.1} parent=1 // pred_region
      %s31 = sadd.s32 0, 0
      %s32 = smul.u32 2, %s31
      %s34 = ssub.s32 256, 256
      %35 = vsyncadd [#allocation6], %s34
      %s36 = smul.addr %s32, 128
      %s37 = scalar_lea.hbm %s1, %s36
      %s38 = sshll.u32 [#allocation5], 4
      %s39 = int_to_ptr.vmem [resolvable:$true] %s38
      %44 = dma.hbm_to_vmem [thread:$0]  %s37, 256, %s39, [#allocation6], 128, 128, 8
    $region9: #{tpu_custom_call.1} parent=1 // pred_fallthru
      _
    // Predicated region
    $region10: #{tpu_custom_call.1} parent=1 // pred_check
      _
    $region11: #{tpu_custom_call.1} parent=1 // pred_check_branch
      %46 = sbr.rel (0) target = $region13
    $region12: #{tpu_custom_call.1} parent=1 // pred_region
      %47 = dma.done [#allocation3], 256
    $region13: #{tpu_custom_call.1} parent=1 // pred_fallthru
      _
    // Predicated region
    $region14: #{tpu_custom_call.1} parent=1 // pred_check
      _
    $region15: #{tpu_custom_call.1} parent=1 // pred_check_branch
      %49 = sbr.rel (0) target = $region17
    $region16: #{tpu_custom_call.1} parent=1 // pred_region
      %50 = dma.done [#allocation6], 256
    $region17: #{tpu_custom_call.1} parent=1 // pred_fallthru
      _
    %s51 = sadd.s32 0, 0
    %s52 = smul.u32 2, %s51
    %s53 = sadd.s32 0, 0
    %s54 = smul.u32 2, %s53
    %p55 = scmp.eq.s32.totalorder 0, 0
    // Predicated region
    $region18: #{tpu_custom_call.1} parent=1 // pred_check
      %p56 = pneg %p55
    $region19: #{tpu_custom_call.1} parent=1 // pred_check_branch
      %58 = sbr.rel (%p56) target = $region21
    $region20: #{tpu_custom_call.1} parent=1 // pred_region
      %59 = vst [vmem:[#allocation7] sm:$0xff] 0.0
      %60 = vst [vmem:[#allocation8] sm:$0xff] 0.0
    $region21: #{tpu_custom_call.1} parent=1 // pred_fallthru
      _
    %v61 = vld [vmem:[#allocation2] sm:$0xff]
    %v62 = vld [vmem:[#allocation2 + $0x8] sm:$0xff]
    %v63 = vld [vmem:[#allocation5] sm:$0xff]
    %v64 = vld [vmem:[#allocation5 + $0x8] sm:$0xff]
    %vm65 = vcmp.eq.f32.partialorder %v63, 1.0
    %vm66 = vcmp.eq.f32.partialorder %v64, 1.0
    %v67 = vsub.f32 1.0, %v61
    %v68 = vsub.f32 1.0, %v62
    %v69 = vsub.f32 1.0, %v63
    %v70 = vsub.f32 1.0, %v64
    %v71 = vmul.f32 %v69, %v69
    %v72 = vmul.f32 %v70, %v70
    %v73 = vmul.f32 %v71, %v71
    %v74 = vmul.f32 %v72, %v72
    %v75 = vsel %vm65, %v61, %v67
    %v76 = vsel %vm66, %v62, %v68
    %v77 = vlog2.pop %v75
    %v78 = vmul.f32 %v77, 0.6931472
    %v79 = vlog2.pop %v76
    %v80 = vmul.f32 %v79, 0.6931472
    %v81 = vmul.f32 %v67, %v67
    %v82 = vmul.f32 %v68, %v68
    %v83 = vmul.f32 %v78, %v81
    %v84 = vmul.f32 %v80, %v82
    %v85 = vmul.f32 %v61, %v61
    %v86 = vmul.f32 %v62, %v62
    %v87 = vmul.f32 %v78, %v85
    %v88 = vmul.f32 %v80, %v86
    %v89 = vmul.f32 %v87, %v73
    %v90 = vmul.f32 %v88, %v74
    %vm91 = vcmp.lt.f32.partialorder %v63, 1.0
    %vm92 = vcmp.lt.f32.partialorder %v64, 1.0
    %v93 = vsel %vm91, %v89, 0.0
    %v94 = vsel %vm92, %v90, 0.0
    %v95 = vsel %vm65, %v83, %v93
    %v96 = vsel %vm66, %v84, %v94
    %v97 = vld [vmem:[#allocation7] sm:$0xff]
    %v98 = vadd.f32 %v95, %v96
    %v99 = vadd.f32 %v97, %v98
    %100 = vst [vmem:[#allocation7] sm:$0xff] %v99
    %v101 = vld [vmem:[#allocation8] sm:$0xff]
    %v102 = vsel %vm65, 1, 0
    %v103 = vsel %vm66, 1, 0
    %v104 = vcvt.s32.f32 %v102
    %v105 = vcvt.s32.f32 %v103
    %v106 = vadd.f32 %v104, %v105
    %v107 = vadd.f32 %v101, %v106
    %108 = vst [vmem:[#allocation8] sm:$0xff] %v107
    // Predicated region
    $region22: #{tpu_custom_call.1} parent=1 // pred_check
      _
    $region23: #{tpu_custom_call.1} parent=1 // pred_check_branch
      %110 = sbr.rel (0) target = $region25
    $region24: #{tpu_custom_call.1} parent=1 // pred_region
      %s112 = ssub.s32 128, 128
      %113 = vsyncadd [#allocation4], %s112
      %s115 = sshll.u32 [#allocation7], 4
      %s116 = int_to_ptr.vmem [resolvable:$true] %s115
      %118 = dma.vmem_to_hbm [thread:$0]  %s116, 128, %s2, [#allocation4]
    $region25: #{tpu_custom_call.1} parent=1 // pred_fallthru
      _
    // Predicated region
    $region26: #{tpu_custom_call.1} parent=1 // pred_check
      _
    $region27: #{tpu_custom_call.1} parent=1 // pred_check_branch
      %120 = sbr.rel (0) target = $region29
    $region28: #{tpu_custom_call.1} parent=1 // pred_region
      %s122 = ssub.s32 128, 128
      %123 = vsyncadd [#allocation9], %s122
      %s125 = sshll.u32 [#allocation8], 4
      %s126 = int_to_ptr.vmem [resolvable:$true] %s125
      %128 = dma.vmem_to_hbm [thread:$0]  %s126, 128, %s3, [#allocation9]
    $region29: #{tpu_custom_call.1} parent=1 // pred_fallthru
      _
    // Predicated region
    $region30: #{tpu_custom_call.1} parent=1 // pred_check
      _
    $region31: #{tpu_custom_call.1} parent=1 // pred_check_branch
      %130 = sbr.rel (0) target = $region33
    $region32: #{tpu_custom_call.1} parent=1 // pred_region
      %131 = dma.done [#allocation4], 128
    $region33: #{tpu_custom_call.1} parent=1 // pred_fallthru
      _
    // Predicated region
    $region34: #{tpu_custom_call.1} parent=1 // pred_check
      _
    $region35: #{tpu_custom_call.1} parent=1 // pred_check_branch
      %133 = sbr.rel (0) target = $region37
    $region36: #{tpu_custom_call.1} parent=1 // pred_region
      %134 = dma.done [#allocation9], 128
    $region37: #{tpu_custom_call.1} parent=1 // pred_fallthru
      _
    %135 = vsyncpa [#allocation3], 1
    %136 = vsyncpa [#allocation6], 1
    %137 = vsyncpa [#allocation4], 1
    %138 = vsyncpa [#allocation9], 1

</llo_original>
